<compile_context>
chip_gen: v6e
topology: v6e:2x2x1
jax: 0.10.0
libtpu: 0.0.40
codegen_flags: <defaults>
</compile_context>

<pallas_src>
import functools

import jax
import jax.numpy as jnp
from jax.experimental import pallas as pl
from jax.experimental.pallas import tpu as pltpu

_LANE = 128
_ROW_TILE = 16          # bf16 native row tile (2 rows per sublane)
_NEG_BIG = -1e30        # mask value for padded logit lanes (avoids inf math)


def _round_up(n, m):
    return ((n + m - 1) // m) * m


def _actor_kernel(n_layers, out_dim, compute_dtype, *refs):
    """Fused MLP forward + log_softmax on one batch tile.

    refs = (x_ref, w_0, b_0, ..., w_{L-1}, b_{L-1}, out_ref)
      x_ref : (TB, in_dim)  f32   (unpadded lanes; cast to bf16 here)
      w_i   : (K, N_pad)    bf16  (K = in_dim for layer 0, else 128-padded)
      b_i   : (1, N_pad)    f32
      out   : (TB, out_dim) f32   (narrow, unpadded store)
    Layers 0..L-2 are Linear+Tanh, layer L-1 is Linear only, then a
    numerically-stable log_softmax over the first `out_dim` lanes.
    """
    x_ref = refs[0]
    out_ref = refs[-1]
    param_refs = refs[1:-1]

    # Cast to bf16 in-kernel (no host-side pad/cast pass over x).
    h = x_ref[...].astype(compute_dtype)
    for li in range(n_layers):
        w = param_refs[2 * li][...]
        b = param_refs[2 * li + 1][...]
        acc = jnp.dot(h, w, preferred_element_type=jnp.float32) + b
        if li < n_layers - 1:
            h = jnp.tanh(acc).astype(compute_dtype)  # back to bf16 for MXU
        else:
            h = acc  # f32 logits (TB, N_last_pad)

    # Mask padded logit lanes so they cannot affect max / sum.
    n_pad = h.shape[-1]
    if n_pad > out_dim:
        lane = jax.lax.broadcasted_iota(jnp.int32, h.shape, 1)
        h = jnp.where(lane < out_dim, h, _NEG_BIG)

    # Numerically stable log_softmax along the last axis.
    m = jnp.max(h, axis=-1, keepdims=True)
    s = h - m
    lse = jnp.log(jnp.sum(jnp.exp(s), axis=-1, keepdims=True))
    logp = s - lse

    # Store only the real columns (narrow masked store: ~20x fewer HBM bytes
    # than a 128-lane padded f32 slab; store slots have plenty of slack).
    out_ref[...] = logp[:, :out_dim].astype(out_ref.dtype)


def prepare_actor_params(params, compute_dtype=jnp.bfloat16):
    """Pad weights/biases for the kernel; cast weights to bf16.

    Layer 0 keeps K = input_dim (matches the unpadded input); all other K's
    and every N are zero-padded to 128 lanes so padded hidden lanes stay 0.
    params: list of (w, b) with w (in_dim, out_dim), b (out_dim,).
    """
    prepared = []
    for li, (w, b) in enumerate(params):
        k, n = w.shape
        k_pad = k if li == 0 else _round_up(k, _LANE)
        n_pad = _round_up(n, _LANE)
        w_pad = jnp.zeros((k_pad, n_pad), compute_dtype)
        w_pad = w_pad.at[:k, :n].set(w.astype(compute_dtype))
        b_pad = jnp.zeros((1, n_pad), jnp.float32)
        b_pad = b_pad.at[:, :n].set(b.reshape(1, -1).astype(jnp.float32))
        prepared.append((w_pad, b_pad))
    return prepared


def actor_forward(x, prepared_params, out_dim, *, tile_batch=1024,
                  compute_dtype=jnp.bfloat16):
    """Fused Actor forward.

    x:               (batch, input_dim) f32
    prepared_params: output of prepare_actor_params
    returns          (batch, out_dim) f32 log-probabilities
    """
    n_layers = len(prepared_params)
    batch, in_dim = x.shape
    assert prepared_params[0][0].shape[0] == in_dim, "layer-0 K must equal input_dim"
    n_last_pad = prepared_params[-1][0].shape[1]

    # Batch tile: big (overhead-amortizing), 16-row aligned for bf16 packing.
    tb = _round_up(min(tile_batch, batch), _ROW_TILE)
    # If the whole batch would fit in one grid step but is large enough to
    # split, halve the tile so grid >= 2 and v7x megacore uses both cores.
    if batch > 2 * _ROW_TILE and pl.cdiv(batch, tb) < 2:
        tb = _round_up(pl.cdiv(batch, 2), _ROW_TILE)
    batch_pad = _round_up(batch, tb)

    # Only the batch axis is ever padded (rows are independent; padded rows
    # are discarded). No lane padding of x.
    x_in = x if batch_pad == batch else jnp.pad(x, ((0, batch_pad - batch), (0, 0)))

    flat_params = []
    for w, b in prepared_params:
        flat_params += [w, b]

    grid = (batch_pad // tb,)

    # x / out tile along the batch; weights & biases map to block (0, 0) every
    # step so they stay VMEM-resident across the whole grid.
    in_specs = [pl.BlockSpec((tb, in_dim), lambda i: (i, 0))]
    for p in flat_params:
        in_specs.append(pl.BlockSpec(p.shape, lambda i: (0, 0)))

    # Advisory cost estimate for XLA scheduling around the custom call.
    flops = 2 * batch_pad * sum(int(w.shape[0]) * int(w.shape[1])
                                for w, _ in prepared_params)
    transcendentals = batch_pad * (
        sum(int(w.shape[1]) for w, _ in prepared_params[:-1]) + int(n_last_pad))
    bytes_accessed = (
        int(x_in.size) * x_in.dtype.itemsize
        + batch_pad * out_dim * 4
        + sum(int(w.size) * w.dtype.itemsize + int(b.size) * b.dtype.itemsize
              for w, b in prepared_params))

    kernel = functools.partial(_actor_kernel, n_layers, out_dim, compute_dtype)

    out = pl.pallas_call(
        kernel,
        out_shape=jax.ShapeDtypeStruct((batch_pad, out_dim), jnp.float32),
        grid=grid,
        in_specs=in_specs,
        out_specs=pl.BlockSpec((tb, out_dim), lambda i: (i, 0)),
        compiler_params=pltpu.CompilerParams(
            dimension_semantics=("parallel",),
            # Covers big tiles on v5e (16 MiB default scoped VMEM); well under
            # v7x's 64 MiB physical VMEM.
            vmem_limit_bytes=48 * 1024 * 1024),
        cost_estimate=pl.CostEstimate(
            flops=flops,
            transcendentals=transcendentals,
            bytes_accessed=bytes_accessed),
    )(x_in, *flat_params)

    return out if batch_pad == batch else out[:batch]


def init_actor_params(key, input_dim, hidden_dims, output_dim):
    """Init matching nn.Linear(in, out): U(-k, k), k = 1/sqrt(in).

    Weights are stored transposed as (in, out) so the kernel computes x @ W.
    """
    dims = [input_dim] + list(hidden_dims) + [output_dim]
    params = []
    for d_in, d_out in zip(dims[:-1], dims[1:]):
        key, kw, kb = jax.random.split(key, 3)
        bound = 1.0 / jnp.sqrt(float(d_in))
        w = jax.random.uniform(kw, (d_in, d_out), jnp.float32, -bound, bound)
        b = jax.random.uniform(kb, (d_out,), jnp.float32, -bound, bound)
        params.append((w, b))
    return params


def actor_reference(x, params, compute_dtype=jnp.float32):
    """Pure-JAX reference. compute_dtype=bf16 emulates the kernel's MXU path."""
    h = x.astype(jnp.float32)
    for i, (w, b) in enumerate(params):
        h = jnp.dot(h.astype(compute_dtype), w.astype(compute_dtype),
                    preferred_element_type=jnp.float32)
        h = h + b.reshape(1, -1).astype(jnp.float32)
        if i < len(params) - 1:
            h = jnp.tanh(h)
    return jax.nn.log_softmax(h, axis=-1)


if __name__ == "__main__":
    key = jax.random.PRNGKey(0)

    batch = 8
    input_dim = 16
    hidden_dims = [32, 32]
    output_dim = 6

    key, kx = jax.random.split(key)
    x = jax.random.normal(kx, (batch, input_dim), jnp.float32)
    params = init_actor_params(key, input_dim, hidden_dims, output_dim)

    prepared = prepare_actor_params(params)
    out = actor_forward(x, prepared, output_dim)
    out = jax.block_until_ready(out)

    assert out.shape == (batch, output_dim)

    # Exact-path check vs a reference that mirrors the bf16-operand matmuls.
    ref_bf16 = actor_reference(x, params, compute_dtype=jnp.bfloat16)
    assert jnp.allclose(out, ref_bf16, atol=1e-3, rtol=1e-3), \
        "mismatch vs bf16-emulating reference"

    # Sanity check vs a full-f32 reference (loose tolerance for bf16 operands).
    ref_f32 = actor_reference(x, params, compute_dtype=jnp.float32)
    assert jnp.allclose(out, ref_f32, atol=5e-2, rtol=5e-2), \
        "mismatch vs f32 reference"

    # log_softmax rows must sum (in prob space) to 1.
    assert jnp.allclose(jnp.sum(jnp.exp(out), axis=-1), 1.0, atol=1e-4)

    print("KERNEL_OK")
</pallas_src>

<mosaic_0001>
module attributes {stable_mosaic.version = 11 : i64} {
  func.func @_actor_kernel(%arg0: i32, %arg1: memref<16x16xf32, #tpu.memory_space<vmem>>, %arg2: memref<16x128xbf16, #tpu.memory_space<vmem>>, %arg3: memref<1x128xf32, #tpu.memory_space<vmem>>, %arg4: memref<128x128xbf16, #tpu.memory_space<vmem>>, %arg5: memref<1x128xf32, #tpu.memory_space<vmem>>, %arg6: memref<128x128xbf16, #tpu.memory_space<vmem>>, %arg7: memref<1x128xf32, #tpu.memory_space<vmem>>, %arg8: memref<16x6xf32, #tpu.memory_space<vmem>>) attributes {dimension_semantics = [#tpu.dimension_semantics<parallel>], iteration_bounds = array<i64: 1>, scalar_prefetch = 0 : i64, scratch_operands = 0 : i64, tpu.core_type = #tpu.core_type<tc>, window_params = [{transform_indices = @transform_0, window_bounds = array<i64: 16, 16>}, {pipeline_mode = #tpu.pipeline_mode<synchronous>, transform_indices = @transform_1, window_bounds = array<i64: 16, 128>}, {pipeline_mode = #tpu.pipeline_mode<synchronous>, transform_indices = @transform_2, window_bounds = array<i64: 1, 128>}, {pipeline_mode = #tpu.pipeline_mode<synchronous>, transform_indices = @transform_3, window_bounds = array<i64: 128, 128>}, {pipeline_mode = #tpu.pipeline_mode<synchronous>, transform_indices = @transform_4, window_bounds = array<i64: 1, 128>}, {pipeline_mode = #tpu.pipeline_mode<synchronous>, transform_indices = @transform_5, window_bounds = array<i64: 128, 128>}, {pipeline_mode = #tpu.pipeline_mode<synchronous>, transform_indices = @transform_6, window_bounds = array<i64: 1, 128>}, {transform_indices = @transform_7, window_bounds = array<i64: 16, 6>}]} {
    %c0 = arith.constant 0 : index
    %c0_0 = arith.constant 0 : index
    %0 = vector.load %arg1[%c0, %c0_0] : memref<16x16xf32, #tpu.memory_space<vmem>>, vector<16x16xf32>
    %1 = arith.truncf %0 : vector<16x16xf32> to vector<16x16xbf16>
    %c0_1 = arith.constant 0 : index
    %c0_2 = arith.constant 0 : index
    %2 = vector.load %arg2[%c0_1, %c0_2] : memref<16x128xbf16, #tpu.memory_space<vmem>>, vector<16x128xbf16>
    %c0_3 = arith.constant 0 : index
    %c0_4 = arith.constant 0 : index
    %3 = vector.load %arg3[%c0_3, %c0_4] : memref<1x128xf32, #tpu.memory_space<vmem>>, vector<1x128xf32>
    %cst = arith.constant dense<0.000000e+00> : vector<16x128xf32>
    %4 = tpu.matmul %1, %2, %cst {dimension_numbers = #tpu.dot_dimension_numbers<[1], [0], [0], [1], [0, 0, 1, 1], [], []>} : vector<16x16xbf16>, vector<16x128xbf16>, vector<16x128xf32> -> vector<16x128xf32>
    %5 = vector.broadcast %3 : vector<1x128xf32> to vector<16x128xf32>
    %6 = arith.addf %4, %5 : vector<16x128xf32>
    %7 = math.tanh %6 : vector<16x128xf32>
    %8 = arith.truncf %7 : vector<16x128xf32> to vector<16x128xbf16>
    %c0_5 = arith.constant 0 : index
    %c0_6 = arith.constant 0 : index
    %9 = vector.load %arg4[%c0_5, %c0_6] : memref<128x128xbf16, #tpu.memory_space<vmem>>, vector<128x128xbf16>
    %c0_7 = arith.constant 0 : index
    %c0_8 = arith.constant 0 : index
    %10 = vector.load %arg5[%c0_7, %c0_8] : memref<1x128xf32, #tpu.memory_space<vmem>>, vector<1x128xf32>
    %cst_9 = arith.constant dense<0.000000e+00> : vector<16x128xf32>
    %11 = tpu.matmul %8, %9, %cst_9 {dimension_numbers = #tpu.dot_dimension_numbers<[1], [0], [0], [1], [0, 0, 1, 1], [], []>} : vector<16x128xbf16>, vector<128x128xbf16>, vector<16x128xf32> -> vector<16x128xf32>
    %12 = vector.broadcast %10 : vector<1x128xf32> to vector<16x128xf32>
    %13 = arith.addf %11, %12 : vector<16x128xf32>
    %14 = math.tanh %13 : vector<16x128xf32>
    %15 = arith.truncf %14 : vector<16x128xf32> to vector<16x128xbf16>
    %c0_10 = arith.constant 0 : index
    %c0_11 = arith.constant 0 : index
    %16 = vector.load %arg6[%c0_10, %c0_11] : memref<128x128xbf16, #tpu.memory_space<vmem>>, vector<128x128xbf16>
    %c0_12 = arith.constant 0 : index
    %c0_13 = arith.constant 0 : index
    %17 = vector.load %arg7[%c0_12, %c0_13] : memref<1x128xf32, #tpu.memory_space<vmem>>, vector<1x128xf32>
    %cst_14 = arith.constant dense<0.000000e+00> : vector<16x128xf32>
    %18 = tpu.matmul %15, %16, %cst_14 {dimension_numbers = #tpu.dot_dimension_numbers<[1], [0], [0], [1], [0, 0, 1, 1], [], []>} : vector<16x128xbf16>, vector<128x128xbf16>, vector<16x128xf32> -> vector<16x128xf32>
    %19 = vector.broadcast %17 : vector<1x128xf32> to vector<16x128xf32>
    %20 = arith.addf %18, %19 : vector<16x128xf32>
    %21 = tpu.iota {dimensions = array<i32: 1>} : vector<16x128xi32>
    %c6_i32 = arith.constant 6 : i32
    %22 = vector.broadcast %c6_i32 : i32 to vector<16x128xi32>
    %23 = arith.cmpi slt, %21, %22 : vector<16x128xi32>
    %cst_15 = arith.constant -1.000000e+30 : f32
    %24 = vector.broadcast %cst_15 : f32 to vector<16x128xf32>
    %25 = arith.select %23, %20, %24 : vector<16x128xi1>, vector<16x128xf32>
    %cst_16 = arith.constant dense<0xFF800000> : vector<16xf32>
    %26 = vector.multi_reduction <maximumf>, %25, %cst_16 [1] : vector<16x128xf32> to vector<16xf32>
    %27 = vector.shape_cast %26 : vector<16xf32> to vector<16x1xf32>
    %28 = vector.broadcast %27 : vector<16x1xf32> to vector<16x128xf32>
    %29 = arith.subf %25, %28 : vector<16x128xf32>
    %30 = math.exp %29 : vector<16x128xf32>
    %cst_17 = arith.constant dense<0.000000e+00> : vector<16xf32>
    %31 = vector.multi_reduction <add>, %30, %cst_17 [1] : vector<16x128xf32> to vector<16xf32>
    %32 = vector.shape_cast %31 : vector<16xf32> to vector<16x1xf32>
    %33 = math.log %32 : vector<16x1xf32>
    %34 = vector.broadcast %33 : vector<16x1xf32> to vector<16x128xf32>
    %35 = arith.subf %29, %34 : vector<16x128xf32>
    %36 = vector.extract_strided_slice %35 {offsets = [0, 0], sizes = [16, 6], strides = [1, 1]} : vector<16x128xf32> to vector<16x6xf32>
    %c0_18 = arith.constant 0 : index
    %c0_19 = arith.constant 0 : index
    %37 = vector.load %arg8[%c0_18, %c0_19] : memref<16x6xf32, #tpu.memory_space<vmem>>, vector<16x6xf32>
    tpu.vector_store %arg8[%c0_18, %c0_19], %36 {strides = array<i32>} : memref<16x6xf32, #tpu.memory_space<vmem>>, vector<16x6xf32>,
    return
  }
  func.func @transform_0(%arg0: i32) -> (i32, i32) {
    %c0_i32 = arith.constant 0 : i32
    %c0_i32_0 = arith.constant 0 : i32
    return %arg0, %c0_i32 : i32, i32
  }
  func.func @transform_1(%arg0: i32) -> (i32, i32) {
    %c0_i32 = arith.constant 0 : i32
    %c0_i32_0 = arith.constant 0 : i32
    %c0_i32_1 = arith.constant 0 : i32
    return %c0_i32, %c0_i32_0 : i32, i32
  }
  func.func @transform_2(%arg0: i32) -> (i32, i32) {
    %c0_i32 = arith.constant 0 : i32
    %c0_i32_0 = arith.constant 0 : i32
    %c0_i32_1 = arith.constant 0 : i32
    return %c0_i32, %c0_i32_0 : i32, i32
  }
  func.func @transform_3(%arg0: i32) -> (i32, i32) {
    %c0_i32 = arith.constant 0 : i32
    %c0_i32_0 = arith.constant 0 : i32
    %c0_i32_1 = arith.constant 0 : i32
    return %c0_i32, %c0_i32_0 : i32, i32
  }
  func.func @transform_4(%arg0: i32) -> (i32, i32) {
    %c0_i32 = arith.constant 0 : i32
    %c0_i32_0 = arith.constant 0 : i32
    %c0_i32_1 = arith.constant 0 : i32
    return %c0_i32, %c0_i32_0 : i32, i32
  }
  func.func @transform_5(%arg0: i32) -> (i32, i32) {
    %c0_i32 = arith.constant 0 : i32
    %c0_i32_0 = arith.constant 0 : i32
    %c0_i32_1 = arith.constant 0 : i32
    return %c0_i32, %c0_i32_0 : i32, i32
  }
  func.func @transform_6(%arg0: i32) -> (i32, i32) {
    %c0_i32 = arith.constant 0 : i32
    %c0_i32_0 = arith.constant 0 : i32
    %c0_i32_1 = arith.constant 0 : i32
    return %c0_i32, %c0_i32_0 : i32, i32
  }
  func.func @transform_7(%arg0: i32) -> (i32, i32) {
    %c0_i32 = arith.constant 0 : i32
    %c0_i32_0 = arith.constant 0 : i32
    return %arg0, %c0_i32 : i32, i32
  }
}

</mosaic_0001>

<llo_original>
// kernel: tpu_custom_call.1
$region0: #{tpu_custom_call.1}
  #allocation0 [shape = 'u32[]', space=smem, size = 0x4, offset = 0x4, fixed_abs, tag = 'smem constant byte address 0x4 - core index']
  #allocation1 [shape = 'u32[144,128]{1,0:T(1,128)}', space=vmem, size = 0x12000, scoped, tag = 'internal scratch']
  %s0 = inlined_call_operand.hbm [shape: f32[16,16], index: 0, kind: input, shape index: {}]
  %s1 = inlined_call_operand.hbm [shape: bf16[16,128], index: 1, kind: input, shape index: {}]
  %s2 = inlined_call_operand.vmem [shape: f32[1,128], index: 2, kind: input, shape index: {}]
  %s3 = inlined_call_operand.hbm [shape: bf16[128,128], index: 3, kind: input, shape index: {}]
  %s4 = inlined_call_operand.vmem [shape: f32[1,128], index: 4, kind: input, shape index: {}]
  %s5 = inlined_call_operand.hbm [shape: bf16[128,128], index: 5, kind: input, shape index: {}]
  %s6 = inlined_call_operand.vmem [shape: f32[1,128], index: 6, kind: input, shape index: {}]
  %s7 = inlined_call_operand.vmem [shape: f32[16,6], index: 7, kind: output, shape index: {}]
  %s8 = sld [smem:[#allocation0]]
  $region54: #{tpu_custom_call.1} parent=0
    _
  %s10 = ssub.s32 1, %s8
  %s11 = scalar_select 0, %s10, %s8
  $region1: #{tpu_custom_call.1} parent=0
    #allocation2 [shape = 'u8[8192]{0}', space=vmem, size = 0x2000, scoped, tag = 'input window, operand 0, single buffered']
    #allocation3 [shape = 's32[1]{0}', space=sflag, size = 0x4, scoped, tag = 'scoped memory for tpu_custom_call.1']
    #allocation4 [shape = 'u8[4096]{0}', space=vmem, size = 0x1000, scoped, tag = 'input window, operand 1, single buffered']
    #allocation5 [shape = 's32[1]{0}', space=sflag, size = 0x4, scoped, tag = 'scoped memory for tpu_custom_call.1']
    #allocation6 [shape = 'u8[32768]{0}', space=vmem, size = 0x8000, scoped, tag = 'input window, operand 3, single buffered']
    #allocation7 [shape = 'u8[32768]{0}', space=vmem, size = 0x8000, scoped, tag = 'input window, operand 5, single buffered']
    #allocation8 [shape = 's32[1]{0}', space=sflag, size = 0x4, scoped, tag = 'scoped memory for tpu_custom_call.1']
    %12 = vsyncpa [#allocation3], 0
    %13 = vsyncpa [#allocation5], 0
    %14 = vsyncpa [#allocation8], 0
    // Predicated region
    $region2: #{tpu_custom_call.1} parent=1 // pred_check
      _
    $region3: #{tpu_custom_call.1} parent=1 // pred_check_branch
      %16 = sbr.rel (0) target = $region5
    $region4: #{tpu_custom_call.1} parent=1 // pred_region
      %s18 = ssub.s32 256, 256
      %19 = vsyncadd [#allocation3], %s18
      %s20 = sshll.u32 [#allocation2], 4
      %s21 = int_to_ptr.vmem [resolvable:$true] %s20
      %26 = dma.hbm_to_vmem [thread:$0]  %s0, 256, %s21, [#allocation3], 128, 128, 8
    $region5: #{tpu_custom_call.1} parent=1 // pred_fallthru
      _
    // Predicated region
    $region6: #{tpu_custom_call.1} parent=1 // pred_check
      _
    $region7: #{tpu_custom_call.1} parent=1 // pred_check_branch
      %28 = sbr.rel (0) target = $region9
    $region8: #{tpu_custom_call.1} parent=1 // pred_region
      %s30 = ssub.s32 128, 128
      %31 = vsyncadd [#allocation5], %s30
      %s32 = sshll.u32 [#allocation4], 4
      %s33 = int_to_ptr.vmem [resolvable:$true] %s32
      %38 = dma.hbm_to_vmem [thread:$0]  %s1, 128, %s33, [#allocation5], 64, 64, 4
    $region9: #{tpu_custom_call.1} parent=1 // pred_fallthru
      _
    // Predicated region
    $region10: #{tpu_custom_call.1} parent=1 // pred_check
      _
    $region11: #{tpu_custom_call.1} parent=1 // pred_check_branch
      %40 = sbr.rel (0) target = $region13
    $region12: #{tpu_custom_call.1} parent=1 // pred_region
      _
    $region13: #{tpu_custom_call.1} parent=1 // pred_fallthru
      _
    // Predicated region
    $region14: #{tpu_custom_call.1} parent=1 // pred_check
      _
    $region15: #{tpu_custom_call.1} parent=1 // pred_check_branch
      %42 = sbr.rel (0) target = $region17
    $region16: #{tpu_custom_call.1} parent=1 // pred_region
      %s44 = ssub.s32 1024, 1024
      %45 = vsyncadd [#allocation5], %s44
      %s46 = sshll.u32 [#allocation6], 4
      %s47 = int_to_ptr.vmem [resolvable:$true] %s46
      %52 = dma.hbm_to_vmem [thread:$0]  %s3, 1024, %s47, [#allocation5], 64, 64, 4
    $region17: #{tpu_custom_call.1} parent=1 // pred_fallthru
      _
    // Predicated region
    $region18: #{tpu_custom_call.1} parent=1 // pred_check
      _
    $region19: #{tpu_custom_call.1} parent=1 // pred_check_branch
      %54 = sbr.rel (0) target = $region21
    $region20: #{tpu_custom_call.1} parent=1 // pred_region
      _
    $region21: #{tpu_custom_call.1} parent=1 // pred_fallthru
      _
    // Predicated region
    $region22: #{tpu_custom_call.1} parent=1 // pred_check
      _
    $region23: #{tpu_custom_call.1} parent=1 // pred_check_branch
      %56 = sbr.rel (0) target = $region25
    $region24: #{tpu_custom_call.1} parent=1 // pred_region
      %s58 = ssub.s32 1024, 1024
      %59 = vsyncadd [#allocation8], %s58
      %s60 = sshll.u32 [#allocation7], 4
      %s61 = int_to_ptr.vmem [resolvable:$true] %s60
      %66 = dma.hbm_to_vmem [thread:$0]  %s5, 1024, %s61, [#allocation8], 64, 64, 4
    $region25: #{tpu_custom_call.1} parent=1 // pred_fallthru
      _
    // Predicated region
    $region26: #{tpu_custom_call.1} parent=1 // pred_check
      _
    $region27: #{tpu_custom_call.1} parent=1 // pred_check_branch
      %68 = sbr.rel (0) target = $region29
    $region28: #{tpu_custom_call.1} parent=1 // pred_region
      _
    $region29: #{tpu_custom_call.1} parent=1 // pred_fallthru
      _
    // Predicated region
    $region30: #{tpu_custom_call.1} parent=1 // pred_check
      _
    $region31: #{tpu_custom_call.1} parent=1 // pred_check_branch
      %70 = sbr.rel (0) target = $region33
    $region32: #{tpu_custom_call.1} parent=1 // pred_region
      %71 = dma.done [#allocation3], 256
    $region33: #{tpu_custom_call.1} parent=1 // pred_fallthru
      _
    // Predicated region
    $region34: #{tpu_custom_call.1} parent=1 // pred_check
      _
    $region35: #{tpu_custom_call.1} parent=1 // pred_check_branch
      %73 = sbr.rel (0) target = $region37
    $region36: #{tpu_custom_call.1} parent=1 // pred_region
      %74 = dma.done [#allocation5], 128
    $region37: #{tpu_custom_call.1} parent=1 // pred_fallthru
      _
    // Predicated region
    $region38: #{tpu_custom_call.1} parent=1 // pred_check
      _
    $region39: #{tpu_custom_call.1} parent=1 // pred_check_branch
      %76 = sbr.rel (0) target = $region41
    $region40: #{tpu_custom_call.1} parent=1 // pred_region
      %77 = dma.done [#allocation5], 1024
    $region41: #{tpu_custom_call.1} parent=1 // pred_fallthru
      _
    // Predicated region
    $region42: #{tpu_custom_call.1} parent=1 // pred_check
      _
    $region43: #{tpu_custom_call.1} parent=1 // pred_check_branch
      %79 = sbr.rel (0) target = $region45
    $region44: #{tpu_custom_call.1} parent=1 // pred_region
      %80 = dma.done [#allocation8], 1024
    $region45: #{tpu_custom_call.1} parent=1 // pred_fallthru
      _
    %v82 = vld [vmem:[#allocation2] sm:$0xff]
    %v83 = vld [vmem:[#allocation2 + $0x8] sm:$0xff]
    %v84 = vpack.c.bf16 %v83, %v82
    %v85 = vld [vmem:[#allocation4] sm:$0xf]
    %v86 = vld [vmem:[#allocation4 + $0x4] sm:$0xf]
    %v87 = vld [vmem:[%s2] sm:$0x1]
    %v89 = vlaneseq
    %v90 = vshrl.u32 %v89, 7
    %v91 = vsub.s32 0, %v90
    %v92 = vrot.slane %v87, %v91
    %v96 = vunpack.c.l.b16 %v85
    %v97 = vunpack.c.l.b16 %v86
    %v98 = vpack.c.b16 %v97, %v96
    %vm100 = vcmask 130048
    %v102 = vsel %vm100, %v84, 0
    %104 = vmatprep.subr.bf16.mxu0 0
    %105 = vmatpush1.bf16.msra.mxu0 0
    %106 = vmatprep.subr.bf16.mxu0 0
    %107 = vmatpush1.bf16.msra.mxu0 0
    %108 = vmatprep.subr.bf16.mxu0 0
    %109 = vmatpush1.bf16.msra.mxu0 0
    %110 = vmatprep.subr.bf16.mxu0 0
    %111 = vmatpush1.bf16.msra.mxu0 0
    %112 = vmatprep.subr.bf16.mxu0 0
    %113 = vmatpush1.bf16.msra.mxu0 0
    %114 = vmatprep.subr.bf16.mxu0 0
    %115 = vmatpush1.bf16.msra.mxu0 0
    %116 = vmatprep.subr.bf16.mxu0 0
    %117 = vmatpush1.bf16.msra.mxu0 0
    %118 = vmatprep.subr.bf16.mxu0 0
    %119 = vmatpush1.bf16.msra.mxu0 %v98
    %120 = vmatprep.subr.bf16.mxu0 0
    %121 = vmatpush2.bf16.msra.mxu0 0
    %122 = vmatprep.subr.bf16.mxu0 0
    %123 = vmatpush2.bf16.msra.mxu0 0
    %124 = vmatprep.subr.bf16.mxu0 0
    %125 = vmatpush2.bf16.msra.mxu0 0
    %126 = vmatprep.subr.bf16.mxu0 0
    %127 = vmatpush2.bf16.msra.mxu0 0
    %128 = vmatprep.subr.bf16.mxu0 0
    %129 = vmatpush2.bf16.msra.mxu0 0
    %130 = vmatprep.subr.bf16.mxu0 0
    %131 = vmatpush2.bf16.msra.mxu0 0
    %132 = vmatprep.subr.bf16.mxu0 0
    %133 = vmatpush2.bf16.msra.mxu0 0
    %134 = vmatprep.subr.bf16.mxu0 0
    %135 = vmatpush2.bf16.msra.mxu0 0
    %136 = vmatprep.mubr.bf16.mxu0 0
    %137 = vmatmul.mubr.bf16.gmra.mxu0 %v102
    %v138 = vpop.f32.mrf.mxu0
    %v139 = vadd.f32 %v92, %v138
    %v140 = vpop.f32.mrf.mxu0
    %v141 = vpop.f32.mrf.mxu0
    %v142 = vadd.f32 %v92, %v141
    %v143 = vpop.f32.mrf.mxu0
    %144 = vdwg.mxu0
    %v145 = vtanh.pop %v139
    %v146 = vtanh.pop %v142
    %v147 = vpack.c.bf16 %v146, %v145
    %v148 = vld [vmem:[#allocation6] sm:$0xf]
    %v149 = vld [vmem:[#allocation6 + $0x4] sm:$0xf]
    %v150 = vld [vmem:[#allocation6 + $0x8] sm:$0xf]
    %v151 = vld [vmem:[#allocation6 + $0xc] sm:$0xf]
    %v152 = vld [vmem:[#allocation6 + $0x10] sm:$0xf]
    %v153 = vld [vmem:[#allocation6 + $0x14] sm:$0xf]
    %v154 = vld [vmem:[#allocation6 + $0x18] sm:$0xf]
    %v155 = vld [vmem:[#allocation6 + $0x1c] sm:$0xf]
    %v156 = vld [vmem:[#allocation6 + $0x20] sm:$0xf]
    %v157 = vld [vmem:[#allocation6 + $0x24] sm:$0xf]
    %v158 = vld [vmem:[#allocation6 + $0x28] sm:$0xf]
    %v159 = vld [vmem:[#allocation6 + $0x2c] sm:$0xf]
    %v160 = vld [vmem:[#allocation6 + $0x30] sm:$0xf]
    %v161 = vld [vmem:[#allocation6 + $0x34] sm:$0xf]
    %v162 = vld [vmem:[#allocation6 + $0x38] sm:$0xf]
    %v163 = vld [vmem:[#allocation6 + $0x3c] sm:$0xf]
    %v164 = vld [vmem:[%s4] sm:$0x1]
    %v166 = vlaneseq
    %v167 = vshrl.u32 %v166, 7
    %v168 = vsub.s32 0, %v167
    %v169 = vrot.slane %v164, %v168
    %v187 = vunpack.c.l.b16 %v148
    %v188 = vunpack.c.l.b16 %v149
    %v189 = vunpack.c.l.b16 %v150
    %v190 = vunpack.c.l.b16 %v151
    %v191 = vunpack.c.l.b16 %v152
    %v192 = vunpack.c.l.b16 %v153
    %v193 = vunpack.c.l.b16 %v154
    %v194 = vunpack.c.l.b16 %v155
    %v195 = vunpack.c.l.b16 %v156
    %v196 = vunpack.c.l.b16 %v157
    %v197 = vunpack.c.l.b16 %v158
    %v198 = vunpack.c.l.b16 %v159
    %v199 = vunpack.c.l.b16 %v160
    %v200 = vunpack.c.l.b16 %v161
    %v201 = vunpack.c.l.b16 %v162
    %v202 = vunpack.c.l.b16 %v163
    %v203 = vpack.c.b16 %v188, %v187
    %v204 = vpack.c.b16 %v190, %v189
    %v205 = vpack.c.b16 %v192, %v191
    %v206 = vpack.c.b16 %v194, %v193
    %v207 = vpack.c.b16 %v196, %v195
    %v208 = vpack.c.b16 %v198, %v197
    %v209 = vpack.c.b16 %v200, %v199
    %v210 = vpack.c.b16 %v202, %v201
    %219 = vmatprep.subr.bf16.mxu0 0
    %220 = vmatpush1.bf16.msra.mxu0 %v210
    %221 = vmatprep.subr.bf16.mxu0 0
    %222 = vmatpush1.bf16.msra.mxu0 %v209
    %223 = vmatprep.subr.bf16.mxu0 0
    %224 = vmatpush1.bf16.msra.mxu0 %v208
    %225 = vmatprep.subr.bf16.mxu0 0
    %226 = vmatpush1.bf16.msra.mxu0 %v207
    %227 = vmatprep.subr.bf16.mxu0 0
    %228 = vmatpush1.bf16.msra.mxu0 %v206
    %229 = vmatprep.subr.bf16.mxu0 0
    %230 = vmatpush1.bf16.msra.mxu0 %v205
    %231 = vmatprep.subr.bf16.mxu0 0
    %232 = vmatpush1.bf16.msra.mxu0 %v204
    %233 = vmatprep.subr.bf16.mxu0 0
    %234 = vmatpush1.bf16.msra.mxu0 %v203
    %235 = vmatprep.subr.bf16.mxu0 0
    %236 = vmatpush2.bf16.msra.mxu0 0
    %237 = vmatprep.subr.bf16.mxu0 0
    %238 = vmatpush2.bf16.msra.mxu0 0
    %239 = vmatprep.subr.bf16.mxu0 0
    %240 = vmatpush2.bf16.msra.mxu0 0
    %241 = vmatprep.subr.bf16.mxu0 0
    %242 = vmatpush2.bf16.msra.mxu0 0
    %243 = vmatprep.subr.bf16.mxu0 0
    %244 = vmatpush2.bf16.msra.mxu0 0
    %245 = vmatprep.subr.bf16.mxu0 0
    %246 = vmatpush2.bf16.msra.mxu0 0
    %247 = vmatprep.subr.bf16.mxu0 0
    %248 = vmatpush2.bf16.msra.mxu0 0
    %249 = vmatprep.subr.bf16.mxu0 0
    %250 = vmatpush2.bf16.msra.mxu0 0
    %251 = vmatprep.mubr.bf16.mxu0 0
    %252 = vmatmul.mubr.bf16.gmra.mxu0 %v147
    %v253 = vpop.f32.mrf.mxu0
    %v254 = vadd.f32 %v169, %v253
    %v255 = vpop.f32.mrf.mxu0
    %v256 = vpop.f32.mrf.mxu0
    %v257 = vadd.f32 %v169, %v256
    %v258 = vpop.f32.mrf.mxu0
    %259 = vdwg.mxu0
    %v260 = vtanh.pop %v254
    %v261 = vtanh.pop %v257
    %v262 = vpack.c.bf16 %v261, %v260
    %v263 = vld [vmem:[#allocation7] sm:$0xf]
    %v264 = vld [vmem:[#allocation7 + $0x4] sm:$0xf]
    %v265 = vld [vmem:[#allocation7 + $0x8] sm:$0xf]
    %v266 = vld [vmem:[#allocation7 + $0xc] sm:$0xf]
    %v267 = vld [vmem:[#allocation7 + $0x10] sm:$0xf]
    %v268 = vld [vmem:[#allocation7 + $0x14] sm:$0xf]
    %v269 = vld [vmem:[#allocation7 + $0x18] sm:$0xf]
    %v270 = vld [vmem:[#allocation7 + $0x1c] sm:$0xf]
    %v271 = vld [vmem:[#allocation7 + $0x20] sm:$0xf]
    %v272 = vld [vmem:[#allocation7 + $0x24] sm:$0xf]
    %v273 = vld [vmem:[#allocation7 + $0x28] sm:$0xf]
    %v274 = vld [vmem:[#allocation7 + $0x2c] sm:$0xf]
    %v275 = vld [vmem:[#allocation7 + $0x30] sm:$0xf]
    %v276 = vld [vmem:[#allocation7 + $0x34] sm:$0xf]
    %v277 = vld [vmem:[#allocation7 + $0x38] sm:$0xf]
    %v278 = vld [vmem:[#allocation7 + $0x3c] sm:$0xf]
    %v279 = vld [vmem:[%s6] sm:$0x1]
    %v281 = vlaneseq
    %v282 = vshrl.u32 %v281, 7
    %v283 = vsub.s32 0, %v282
    %v284 = vrot.slane %v279, %v283
    %v302 = vunpack.c.l.b16 %v263
    %v303 = vunpack.c.l.b16 %v264
    %v304 = vunpack.c.l.b16 %v265
    %v305 = vunpack.c.l.b16 %v266
    %v306 = vunpack.c.l.b16 %v267
    %v307 = vunpack.c.l.b16 %v268
    %v308 = vunpack.c.l.b16 %v269
    %v309 = vunpack.c.l.b16 %v270
    %v310 = vunpack.c.l.b16 %v271
    %v311 = vunpack.c.l.b16 %v272
    %v312 = vunpack.c.l.b16 %v273
    %v313 = vunpack.c.l.b16 %v274
    %v314 = vunpack.c.l.b16 %v275
    %v315 = vunpack.c.l.b16 %v276
    %v316 = vunpack.c.l.b16 %v277
    %v317 = vunpack.c.l.b16 %v278
    %v318 = vpack.c.b16 %v303, %v302
    %v319 = vpack.c.b16 %v305, %v304
    %v320 = vpack.c.b16 %v307, %v306
    %v321 = vpack.c.b16 %v309, %v308
    %v322 = vpack.c.b16 %v311, %v310
    %v323 = vpack.c.b16 %v313, %v312
    %v324 = vpack.c.b16 %v315, %v314
    %v325 = vpack.c.b16 %v317, %v316
    %334 = vmatprep.subr.bf16.mxu0 0
    %335 = vmatpush1.bf16.msra.mxu0 %v325
    %336 = vmatprep.subr.bf16.mxu0 0
    %337 = vmatpush1.bf16.msra.mxu0 %v324
    %338 = vmatprep.subr.bf16.mxu0 0
    %339 = vmatpush1.bf16.msra.mxu0 %v323
    %340 = vmatprep.subr.bf16.mxu0 0
    %341 = vmatpush1.bf16.msra.mxu0 %v322
    %342 = vmatprep.subr.bf16.mxu0 0
    %343 = vmatpush1.bf16.msra.mxu0 %v321
    %344 = vmatprep.subr.bf16.mxu0 0
    %345 = vmatpush1.bf16.msra.mxu0 %v320
    %346 = vmatprep.subr.bf16.mxu0 0
    %347 = vmatpush1.bf16.msra.mxu0 %v319
    %348 = vmatprep.subr.bf16.mxu0 0
    %349 = vmatpush1.bf16.msra.mxu0 %v318
    %350 = vmatprep.subr.bf16.mxu0 0
    %351 = vmatpush2.bf16.msra.mxu0 0
    %352 = vmatprep.subr.bf16.mxu0 0
    %353 = vmatpush2.bf16.msra.mxu0 0
    %354 = vmatprep.subr.bf16.mxu0 0
    %355 = vmatpush2.bf16.msra.mxu0 0
    %356 = vmatprep.subr.bf16.mxu0 0
    %357 = vmatpush2.bf16.msra.mxu0 0
    %358 = vmatprep.subr.bf16.mxu0 0
    %359 = vmatpush2.bf16.msra.mxu0 0
    %360 = vmatprep.subr.bf16.mxu0 0
    %361 = vmatpush2.bf16.msra.mxu0 0
    %362 = vmatprep.subr.bf16.mxu0 0
    %363 = vmatpush2.bf16.msra.mxu0 0
    %364 = vmatprep.subr.bf16.mxu0 0
    %365 = vmatpush2.bf16.msra.mxu0 0
    %366 = vmatprep.mubr.bf16.mxu0 0
    %367 = vmatmul.mubr.bf16.gmra.mxu0 %v262
    %v368 = vpop.f32.mrf.mxu0
    %v369 = vadd.f32 %v284, %v368
    %v370 = vpop.f32.mrf.mxu0
    %v371 = vpop.f32.mrf.mxu0
    %v372 = vadd.f32 %v284, %v371
    %v373 = vpop.f32.mrf.mxu0
    %374 = vdwg.mxu0
    %v375 = vlaneseq
    %v376 = vand.u32 %v375, 127
    %vm377 = vcmp.lt.s32.totalorder %v376, 6
    %v378 = vsel %vm377, %v369, -1e+30
    %v379 = vsel %vm377, %v372, -1e+30
    %380 = vmax.xlane.f32.xlu0 %v378
    %v381 = vpop.xlane.xlu0 %380
    %382 = vmax.xlane.f32.xlu0 %v379
    %v383 = vpop.xlane.xlu0 %382
    %v384 = vsub.f32 %v378, %v381
    %v385 = vsub.f32 %v379, %v383
    %v386 = vmul.f32 %v384, 1.442695
    %v387 = vpow.pop %v386
    %v388 = vmul.f32 %v385, 1.442695
    %v389 = vpow.pop %v388
    %390 = vadd.xlane.f32.xlu0 %v387
    %v391 = vpop.xlane.xlu0 %390
    %392 = vadd.xlane.f32.xlu0 %v389
    %v393 = vpop.xlane.xlu0 %392
    %v394 = vlog2.pop %v391
    %v395 = vmul.f32 %v394, 0.6931472
    %v396 = vlog2.pop %v393
    %v397 = vmul.f32 %v396, 0.6931472
    %v398 = vsub.f32 %v384, %v395
    %v399 = vsub.f32 %v385, %v397
    %vm400 = vcmask 48128
    %401 = vst.msk [vmem:[%s7] sm:$0xff] %vm400, %v398
    %402 = vst.msk [vmem:[%s7 + $0x8] sm:$0xff] %vm400, %v399
    // Predicated region
    $region46: #{tpu_custom_call.1} parent=1 // pred_check
      _
    $region47: #{tpu_custom_call.1} parent=1 // pred_check_branch
      %404 = sbr.rel (0) target = $region49
    $region48: #{tpu_custom_call.1} parent=1 // pred_region
      _
    $region49: #{tpu_custom_call.1} parent=1 // pred_fallthru
      _
    // Predicated region
    $region50: #{tpu_custom_call.1} parent=1 // pred_check
      _
    $region51: #{tpu_custom_call.1} parent=1 // pred_check_branch
      %406 = sbr.rel (0) target = $region53
    $region52: #{tpu_custom_call.1} parent=1 // pred_region
      _
    $region53: #{tpu_custom_call.1} parent=1 // pred_fallthru
      _
    %407 = vsyncpa [#allocation3], 1
    %408 = vsyncpa [#allocation5], 1
    %409 = vsyncpa [#allocation8], 1

</llo_original>
